<compile_context>
chip_gen: v5e
topology: v5e:2x2
jax: 0.10.0
libtpu: 0.0.40
codegen_flags: <defaults>
</compile_context>

<pallas_src>
import functools

import jax
import jax.numpy as jnp
from jax import lax
from jax.experimental import pallas as pl
from jax.experimental.pallas import tpu as pltpu

_EPS = 1e-8
_SMALL_BYTES = 256 * 1024          # fast-path threshold on K*D*itemsize
_TILE_CANDIDATES = (1024, 512, 256, 128)   # lane-tile sizes (roofline plateau)


# ----------------------------------------------------------------------------
# Small helpers traced inside the kernels (operate on the (K, K) Gram matrix).
# ----------------------------------------------------------------------------
def _eye_mask(k):
    rows = lax.broadcasted_iota(jnp.int32, (k, k), 0)
    cols = lax.broadcasted_iota(jnp.int32, (k, k), 1)
    return rows == cols


def _fold_transform(gram, build_ms):
    """Fold a chain of gram-linear methods into one KxK transform.

    All math is O(K^2)/O(K^3) with tiny K -> negligible; runs exactly once.
    """
    m_total = None
    for i, build_m in enumerate(build_ms):
        m_i = build_m(gram)                                        # (K, K)
        m_total = m_i if m_total is None else jnp.dot(
            m_i, m_total, preferred_element_type=jnp.float32)
        if i + 1 < len(build_ms):
            # Gram of the transformed gradients: M_i @ gram @ M_i.T
            tmp = jnp.dot(m_i, gram, preferred_element_type=jnp.float32)
            gram = lax.dot_general(
                tmp, m_i, dimension_numbers=(((1,), (1,)), ((), ())),
                preferred_element_type=jnp.float32)
    return m_total


# ----------------------------------------------------------------------------
# Kernel 1: small-D fast path — whole array resident, single grid step.
# ----------------------------------------------------------------------------
def _single_block_kernel(g_ref, o_ref, *, build_ms):
    g = g_ref[...].astype(jnp.float32)                             # (K, D)
    gram = lax.dot_general(
        g, g, dimension_numbers=(((1,), (1,)), ((), ())),
        preferred_element_type=jnp.float32)                        # (K, K)
    m = _fold_transform(gram, build_ms)
    o_ref[...] = jnp.dot(m, g, preferred_element_type=jnp.float32).astype(o_ref.dtype)


# ----------------------------------------------------------------------------
# Kernel 2: two-phase, D-tiled reduce -> apply.
#   phase 0: accumulate Gram (+ optional copy into resident VMEM scratch)
#   phase 1: apply the folded KxK transform tile by tile.
# ----------------------------------------------------------------------------
def _two_phase_kernel(g_ref, o_ref, gram_ref, m_ref, *res,
                      build_ms, d, tile):
    resident = len(res) == 1
    phase = pl.program_id(0)          # 0 = reduce, 1 = apply
    t = pl.program_id(1)              # D-tile index
    last_t = pl.num_programs(1) - 1

    @pl.when(jnp.logical_and(phase == 0, t == 0))
    def _init():
        gram_ref[...] = jnp.zeros_like(gram_ref)

    @pl.when(phase == 0)
    def _reduce():
        g = g_ref[...].astype(jnp.float32)                         # (K, tile)
        # Ragged-D tail handling: columns past D (OOB block padding) are
        # masked to zero so they never pollute the Gram (or the resident copy).
        col = lax.broadcasted_iota(jnp.int32, g.shape, 1)
        g = jnp.where(t * tile + col < d, g, 0.0)
        if resident:
            off = pl.multiple_of(t * tile, 128)
            res[0][:, pl.ds(off, tile)] = g
        # NOTE(v7x): contracting the lane axis of both operands may emit an
        # XLU transpose for the RHS; with K<=8 this hides under DMA on
        # v5e/v6e.  Revisit the staging if the bundle dump shows vxpose
        # dominating on v7x's 3.2 TB/s HBM.
        gram_ref[...] += lax.dot_general(
            g, g, dimension_numbers=(((1,), (1,)), ((), ())),
            preferred_element_type=jnp.float32)

    # Fold at the END of phase 0 so it overlaps the phase-1 tile-0 prefetch.
    @pl.when(jnp.logical_and(phase == 0, t == last_t))
    def _fold():
        m_ref[...] = _fold_transform(gram_ref[...], build_ms)

    @pl.when(phase == 1)
    def _apply():
        if resident:
            off = pl.multiple_of(t * tile, 128)
            g = res[0][:, pl.ds(off, tile)]                        # already f32
        else:
            g = g_ref[...].astype(jnp.float32)
        o_ref[...] = jnp.dot(m_ref[...], g,
                             preferred_element_type=jnp.float32).astype(o_ref.dtype)


# ----------------------------------------------------------------------------
# Tile planning.
# ----------------------------------------------------------------------------
def _vmem_capacity_bytes():
    try:
        return int(pltpu.get_tpu_info().vmem_capacity_bytes)
    except Exception:
        return 64 << 20   # conservative fallback (v7x per-TensorCore VMEM)


def _plan_tiles(K, D, itemsize, force_streaming):
    cap = _vmem_capacity_bytes()
    tile = _TILE_CANDIDATES[-1]
    for cand in _TILE_CANDIDATES:
        if pl.cdiv(D, cand) >= 4:
            tile = cand
            break
    num_tiles = pl.cdiv(D, tile)
    d_pad = num_tiles * tile

    stream_bytes = 2 * 2 * K * tile * itemsize      # double-buffered in + out
    small_scratch = 2 * 8 * 128 * 4                 # gram + m (padded vregs)
    resident_bytes = K * d_pad * 4                  # persistent f32 copy
    resident = (not force_streaming) and (
        stream_bytes + small_scratch + resident_bytes <= cap // 2)

    need = stream_bytes + small_scratch + (resident_bytes if resident else 0)
    vmem_limit = int(min(cap * 9 // 10, max(need + (8 << 20), 16 << 20)))
    return tile, num_tiles, d_pad, resident, vmem_limit


# ----------------------------------------------------------------------------
# Wrapper: run the fused reduce -> apply pipeline for a chain of gram-linear
# methods.
# ----------------------------------------------------------------------------
def _apply_gram_linear(grads, build_ms, force_streaming=False):
    K, D = grads.shape
    itemsize = jnp.dtype(grads.dtype).itemsize
    build_ms = tuple(build_ms)

    flops = int(4 * K * K * D)                 # Gram + apply matmuls
    transcendentals = int(16 * K * max(1, len(build_ms)))

    # --- Small-D fast path: one grid step, whole array in VMEM. -------------
    if (not force_streaming) and K * D * itemsize <= _SMALL_BYTES:
        kernel = functools.partial(_single_block_kernel, build_ms=build_ms)
        return pl.pallas_call(
            kernel,
            out_shape=jax.ShapeDtypeStruct((K, D), grads.dtype),
            grid=(1,),
            in_specs=[pl.BlockSpec((K, D), lambda i: (0, 0))],
            out_specs=pl.BlockSpec((K, D), lambda i: (0, 0)),
            compiler_params=pltpu.CompilerParams(
                dimension_semantics=("arbitrary",)),
            cost_estimate=pl.CostEstimate(
                flops=flops, transcendentals=transcendentals,
                bytes_accessed=int(2 * K * D * itemsize)),
        )(grads)

    # --- Two-phase tiled path. ----------------------------------------------
    tile, num_tiles, d_pad, resident, vmem_limit = _plan_tiles(
        K, D, itemsize, force_streaming)

    if resident:
        # Phase 1 pins the input block to the last phase-0 block -> zero extra
        # HBM reads in the apply phase (1 read + 1 write total).
        in_map = lambda p, t: (0, t * (1 - p) + (num_tiles - 1) * p)
    else:
        in_map = lambda p, t: (0, t)
    # Output block stays at block 0 during phase 0 (never advanced -> no
    # writeback), then tracks the tile index in phase 1.  The output does NOT
    # alias the input, so even a conservative writeback is harmless.
    out_map = lambda p, t: (0, t * p)

    scratch = [pltpu.VMEM((K, K), jnp.float32),    # Gram accumulator
               pltpu.VMEM((K, K), jnp.float32)]    # folded transform M
    if resident:
        scratch.append(pltpu.VMEM((K, d_pad), jnp.float32))

    kernel = functools.partial(_two_phase_kernel, build_ms=build_ms,
                               d=D, tile=tile)

    bytes_accessed = int((2 if resident else 3) * K * D * itemsize)

    return pl.pallas_call(
        kernel,
        out_shape=jax.ShapeDtypeStruct((K, D), grads.dtype),
        grid=(2, num_tiles),
        in_specs=[pl.BlockSpec((K, tile), in_map)],
        out_specs=pl.BlockSpec((K, tile), out_map),
        scratch_shapes=scratch,
        compiler_params=pltpu.CompilerParams(
            dimension_semantics=("arbitrary", "arbitrary"),
            vmem_limit_bytes=vmem_limit),
        cost_estimate=pl.CostEstimate(
            flops=flops, transcendentals=transcendentals,
            bytes_accessed=bytes_accessed),
    )(grads)


# ----------------------------------------------------------------------------
# MOO methods + Compose (mirrors the PyTorch class structure)
# ----------------------------------------------------------------------------
class MOOMethod:
    requires_input: bool = False
    gram_linear: bool = False

    def forward(self, grads, inputs=None, outputs=None):
        raise NotImplementedError("You need to implement the forward pass.")

    def __call__(self, grads, inputs=None, outputs=None):
        return self.forward(grads, inputs, outputs)


class _GramLinearMethod(MOOMethod):
    """MOO method of the form  out = build_m(gram) @ grads."""
    gram_linear = True

    def build_m(self, gram):          # (K, K) f32 -> (K, K) f32
        raise NotImplementedError

    def forward(self, grads, inputs=None, outputs=None):
        return _apply_gram_linear(grads, (self.build_m,))


class GradNormBalance(_GramLinearMethod):
    """g_i <- g_i * mean_j(||g_j||) / ||g_i||   (M = diag(scale))."""

    def build_m(self, gram):
        k = gram.shape[0]
        eye = _eye_mask(k)
        sqn = jnp.sum(jnp.where(eye, gram, 0.0), axis=1, keepdims=True)   # (K,1)
        norms = jnp.sqrt(sqn + _EPS)                                      # (K,1)
        mean_norm = jnp.sum(norms, axis=0, keepdims=True) * (1.0 / k)     # (1,1)
        scale = mean_norm * lax.rsqrt(sqn + _EPS)                         # (K,1)
        return jnp.where(eye, scale, 0.0)                                 # diag(scale)


class ConflictProject(_GramLinearMethod):
    """g_i <- g_i - sum_{j!=i} min(0, g_i . g_j)/||g_j||^2 * g_j   (M = I - coeff)."""

    def build_m(self, gram):
        k = gram.shape[0]
        eye = _eye_mask(k)
        sqn_row = jnp.sum(jnp.where(eye, gram, 0.0), axis=0, keepdims=True)  # (1,K)
        inv_sqn = pl.reciprocal(sqn_row + _EPS, approx=False)                # (1,K)
        coeff = jnp.minimum(gram, 0.0) * inv_sqn                             # (K,K)
        coeff = jnp.where(eye, 0.0, coeff)
        return eye.astype(jnp.float32) - coeff


class Compose(MOOMethod):
    """Apply composed MOO methods sequentially (as in the PyTorch module)."""

    def __init__(self, *modules: MOOMethod):
        super().__init__()
        self.methods = list(modules)
        self.requires_input = any(m.requires_input for m in modules)

    def forward(self, grads, inputs=None, outputs=None):
        # All gram-linear methods -> fold into ONE fused pallas_call
        # (single launch, single Gram reduction, single apply pass).
        if self.methods and all(getattr(m, "gram_linear", False) for m in self.methods):
            return _apply_gram_linear(grads, tuple(m.build_m for m in self.methods))
        # Generic fallback: exactly the PyTorch sequential semantics.
        for m in self.methods:
            grads = m(grads, inputs, outputs)
        return grads


# ----------------------------------------------------------------------------
# Pure-JAX references for correctness checking
# ----------------------------------------------------------------------------
def _ref_norm_balance(g):
    norms = jnp.sqrt(jnp.sum(g * g, axis=-1, keepdims=True) + _EPS)
    return g * (jnp.mean(norms) / norms)


def _ref_conflict_project(g):
    gram = g @ g.T
    sqn = jnp.sum(g * g, axis=-1)
    coeff = jnp.minimum(gram, 0.0) / (sqn[None, :] + _EPS)
    coeff = coeff * (1.0 - jnp.eye(g.shape[0], dtype=g.dtype))
    return g - coeff @ g


def _check(name, out, ref):
    assert out.shape == ref.shape and out.dtype == ref.dtype, name
    assert jnp.allclose(out, ref, atol=1e-3, rtol=1e-3), f"{name} mismatch"


if __name__ == "__main__":
    key = jax.random.PRNGKey(0)
    k1, k2, k3, k4, k5 = jax.random.split(key, 5)

    compose = Compose(GradNormBalance(), ConflictProject())

    # --- Case 1: small D (fast single-step path), K=8 tasks, D=512 ----------
    K, D = 8, 512
    grads = jax.random.normal(k1, (K, D), dtype=jnp.float32)
    inputs = jax.random.normal(k2, (K, 32), dtype=jnp.float32)   # unused (requires_input=False)
    outputs = jax.random.normal(k3, (K,), dtype=jnp.float32)     # unused

    ref_balance = _ref_norm_balance(grads)
    ref_project = _ref_conflict_project(grads)
    ref_composed = _ref_conflict_project(_ref_norm_balance(grads))

    out_b = jax.block_until_ready(GradNormBalance()(grads))
    _check("balance", out_b, ref_balance)

    out_p = jax.block_until_ready(ConflictProject()(grads))
    _check("project", out_p, ref_project)

    out_c = jax.block_until_ready(compose(grads, inputs, outputs))
    _check("compose", out_c, ref_composed)

    # --- Case 2: larger ragged D -> two-phase tiled, VMEM-resident path -----
    K2, D2 = 8, 9000
    g2 = jax.random.normal(k4, (K2, D2), dtype=jnp.float32)
    ref2 = _ref_conflict_project(_ref_norm_balance(g2))
    out2 = jax.block_until_ready(compose(g2, None, None))
    _check("compose_tiled_resident", out2, ref2)

    # --- Case 3: same shape, forcing the streaming (non-resident) fallback --
    out3 = jax.block_until_ready(_apply_gram_linear(
        g2, (GradNormBalance().build_m, ConflictProject().build_m),
        force_streaming=True))
    _check("compose_tiled_streaming", out3, ref2)

    # --- Case 4: K not a multiple of 8, ragged small D (fast path) ----------
    g4 = jax.random.normal(k5, (5, 300), dtype=jnp.float32)
    ref4 = _ref_conflict_project(_ref_norm_balance(g4))
    out4 = jax.block_until_ready(compose(g4, None, None))
    _check("compose_small_ragged", out4, ref4)

    print("KERNEL_OK")
</pallas_src>

<mosaic_0001>
module attributes {stable_mosaic.version = 11 : i64} {
  func.func @_single_block_kernel(%arg0: i32, %arg1: memref<8x512xf32, #tpu.memory_space<vmem>>, %arg2: memref<8x512xf32, #tpu.memory_space<vmem>>) attributes {dimension_semantics = [#tpu.dimension_semantics<arbitrary>], iteration_bounds = array<i64: 1>, scalar_prefetch = 0 : i64, scratch_operands = 0 : i64, tpu.core_type = #tpu.core_type<tc>, window_params = [{pipeline_mode = #tpu.pipeline_mode<synchronous>, transform_indices = @transform_0, window_bounds = array<i64: 8, 512>}, {pipeline_mode = #tpu.pipeline_mode<synchronous>, transform_indices = @transform_1, window_bounds = array<i64: 8, 512>}]} {
    %c0 = arith.constant 0 : index
    %c0_0 = arith.constant 0 : index
    %0 = vector.load %arg1[%c0, %c0_0] : memref<8x512xf32, #tpu.memory_space<vmem>>, vector<8x512xf32>
    %cst = arith.constant dense<0.000000e+00> : vector<8x8xf32>
    %1 = tpu.matmul %0, %0, %cst {dimension_numbers = #tpu.dot_dimension_numbers<[1], [1], [0], [0], [0, 0, 1, 0], [], []>} : vector<8x512xf32>, vector<8x512xf32>, vector<8x8xf32> -> vector<8x8xf32>
    %2 = tpu.iota {dimensions = array<i32: 0>} : vector<8x8xi32>
    %3 = tpu.iota {dimensions = array<i32: 1>} : vector<8x8xi32>
    %4 = arith.cmpi eq, %2, %3 : vector<8x8xi32>
    %cst_1 = arith.constant 0.000000e+00 : f32
    %5 = vector.broadcast %cst_1 : f32 to vector<8x8xf32>
    %6 = arith.select %4, %1, %5 : vector<8x8xi1>, vector<8x8xf32>
    %cst_2 = arith.constant dense<0.000000e+00> : vector<8xf32>
    %7 = vector.multi_reduction <add>, %6, %cst_2 [1] : vector<8x8xf32> to vector<8xf32>
    %8 = vector.shape_cast %7 : vector<8xf32> to vector<8x1xf32>
    %cst_3 = arith.constant 9.99999993E-9 : f32
    %9 = vector.broadcast %cst_3 : f32 to vector<8x1xf32>
    %10 = arith.addf %8, %9 : vector<8x1xf32>
    %11 = math.sqrt %10 : vector<8x1xf32>
    %cst_4 = arith.constant dense<0.000000e+00> : vector<1xf32>
    %12 = vector.multi_reduction <add>, %11, %cst_4 [0] : vector<8x1xf32> to vector<1xf32>
    %13 = vector.shape_cast %12 : vector<1xf32> to vector<1x1xf32>
    %cst_5 = arith.constant 1.250000e-01 : f32
    %14 = vector.broadcast %cst_5 : f32 to vector<1x1xf32>
    %15 = arith.mulf %13, %14 : vector<1x1xf32>
    %cst_6 = arith.constant 9.99999993E-9 : f32
    %16 = vector.broadcast %cst_6 : f32 to vector<8x1xf32>
    %17 = arith.addf %8, %16 : vector<8x1xf32>
    %18 = math.rsqrt %17 : vector<8x1xf32>
    %19 = vector.broadcast %15 : vector<1x1xf32> to vector<8x1xf32>
    %20 = arith.mulf %19, %18 : vector<8x1xf32>
    %cst_7 = arith.constant 0.000000e+00 : f32
    %21 = vector.shape_cast %20 : vector<8x1xf32> to vector<8x1xf32>
    %22 = vector.broadcast %21 : vector<8x1xf32> to vector<8x8xf32>
    %23 = vector.broadcast %cst_7 : f32 to vector<8x8xf32>
    %24 = arith.select %4, %22, %23 : vector<8x8xi1>, vector<8x8xf32>
    %cst_8 = arith.constant dense<0.000000e+00> : vector<8x512xf32>
    %25 = tpu.matmul %24, %0, %cst_8 {dimension_numbers = #tpu.dot_dimension_numbers<[1], [0], [0], [1], [0, 0, 1, 1], [], []>} : vector<8x8xf32>, vector<8x512xf32>, vector<8x512xf32> -> vector<8x512xf32>
    %c0_9 = arith.constant 0 : index
    %c0_10 = arith.constant 0 : index
    %26 = vector.load %arg2[%c0_9, %c0_10] : memref<8x512xf32, #tpu.memory_space<vmem>>, vector<8x512xf32>
    tpu.vector_store %arg2[%c0_9, %c0_10], %25 {strides = array<i32>} : memref<8x512xf32, #tpu.memory_space<vmem>>, vector<8x512xf32>,
    return
  }
  func.func @transform_0(%arg0: i32) -> (i32, i32) {
    %c0_i32 = arith.constant 0 : i32
    %c0_i32_0 = arith.constant 0 : i32
    %c0_i32_1 = arith.constant 0 : i32
    return %c0_i32, %c0_i32_0 : i32, i32
  }
  func.func @transform_1(%arg0: i32) -> (i32, i32) {
    %c0_i32 = arith.constant 0 : i32
    %c0_i32_0 = arith.constant 0 : i32
    %c0_i32_1 = arith.constant 0 : i32
    return %c0_i32, %c0_i32_0 : i32, i32
  }
}

</mosaic_0001>

<llo_original>
// kernel: tpu_custom_call.1
$region0: #{tpu_custom_call.1}
  #allocation0 [shape = 'u32[]', space=smem, size = 0x4, offset = 0x4, fixed_abs, tag = 'smem constant byte address 0x4 - core index']
  #allocation1 [shape = 'u32[72,128]{1,0:T(1,128)}', space=vmem, size = 0x9000, scoped, tag = 'internal scratch']
  %s0 = inlined_call_operand.hbm [shape: f32[8,512], index: 0, kind: input, shape index: {}]
  %s1 = inlined_call_operand.hbm [shape: f32[8,512], index: 1, kind: output, shape index: {}]
  %s2 = sld [smem:[#allocation0]]
  $region18: #{tpu_custom_call.1} parent=0
    _
  %s4 = ssub.s32 1, %s2
  %s5 = scalar_select 0, %s4, %s2
  $region1: #{tpu_custom_call.1} parent=0
    #allocation2 [shape = 'u8[16384]{0}', space=vmem, size = 0x4000, scoped, tag = 'input window, operand 0, single buffered']
    #allocation3 [shape = 's32[1]{0}', space=sflag, size = 0x4, scoped, tag = 'scoped memory for tpu_custom_call.1']
    #allocation4 [shape = 's32[1]{0}', space=sflag, size = 0x4, scoped, tag = 'scoped memory for tpu_custom_call.1']
    #allocation5 [shape = 'u8[16384]{0}', space=vmem, size = 0x4000, scoped, tag = 'output window, operand 0, single buffered']
    %6 = vsyncpa [#allocation3], 0
    %7 = vsyncpa [#allocation4], 0
    // Predicated region
    $region2: #{tpu_custom_call.1} parent=1 // pred_check
      _
    $region3: #{tpu_custom_call.1} parent=1 // pred_check_branch
      %9 = sbr.rel (0) target = $region5
    $region4: #{tpu_custom_call.1} parent=1 // pred_region
      %11 = vsyncadd [#allocation3], 0
      %s13 = sshll.u32 %s0, 4
      %s14 = int_to_ptr.hbm [resolvable:$true] %s13
      %s15 = sshll.u32 [#allocation2], 4
      %s16 = int_to_ptr.vmem [resolvable:$true] %s15
      %18 = dma.hbm_to_vmem [thread:$0]  %s14, 512, %s16, [#allocation3]
    $region5: #{tpu_custom_call.1} parent=1 // pred_fallthru
      _
    // Predicated region
    $region6: #{tpu_custom_call.1} parent=1 // pred_check
      _
    $region7: #{tpu_custom_call.1} parent=1 // pred_check_branch
      %20 = sbr.rel (0) target = $region9
    $region8: #{tpu_custom_call.1} parent=1 // pred_region
      %22 = dma.done [#allocation3], 512
    $region9: #{tpu_custom_call.1} parent=1 // pred_fallthru
      _
    %v23 = vld [vmem:[#allocation2] sm:$0xff]
    %v24 = vld [vmem:[#allocation2 + $0x8] sm:$0xff]
    %v25 = vld [vmem:[#allocation2 + $0x10] sm:$0xff]
    %v26 = vld [vmem:[#allocation2 + $0x18] sm:$0xff]
    %27 = vmatpush.xpose.msra.mxu0 0.0
    %28 = vmatpush.xpose.msra.mxu0 0.0
    %29 = vmatpush.xpose.msra.mxu0 0.0
    %30 = vmatpush.xpose.msra.mxu0 0.0
    %31 = vmatpush.xpose.msra.mxu0 0.0
    %32 = vmatpush.xpose.msra.mxu0 0.0
    %33 = vmatpush.xpose.msra.mxu0 0.0
    %34 = vmatpush.xpose.msra.mxu0 0.0
    %35 = vmatpush.xpose.msra.mxu0 0.0
    %36 = vmatpush.xpose.msra.mxu0 0.0
    %37 = vmatpush.xpose.msra.mxu0 0.0
    %38 = vmatpush.xpose.msra.mxu0 0.0
    %39 = vmatpush.xpose.msra.mxu0 0.0
    %40 = vmatpush.xpose.msra.mxu0 0.0
    %41 = vmatpush.xpose.msra.mxu0 0.0
    %42 = vmatpush.xpose.msra.mxu0 %v23
    %43 = vmatmul.f32.gmra.mxu0 %v23
    %v44 = vpop.f32.mrf.mxu0
    %v45 = vadd.f32 0.0, %v44
    %46 = vdwg.mxu0
    %47 = vmatpush.xpose.msra.mxu0 0.0
    %48 = vmatpush.xpose.msra.mxu0 0.0
    %49 = vmatpush.xpose.msra.mxu0 0.0
    %50 = vmatpush.xpose.msra.mxu0 0.0
    %51 = vmatpush.xpose.msra.mxu0 0.0
    %52 = vmatpush.xpose.msra.mxu0 0.0
    %53 = vmatpush.xpose.msra.mxu0 0.0
    %54 = vmatpush.xpose.msra.mxu0 0.0
    %55 = vmatpush.xpose.msra.mxu0 0.0
    %56 = vmatpush.xpose.msra.mxu0 0.0
    %57 = vmatpush.xpose.msra.mxu0 0.0
    %58 = vmatpush.xpose.msra.mxu0 0.0
    %59 = vmatpush.xpose.msra.mxu0 0.0
    %60 = vmatpush.xpose.msra.mxu0 0.0
    %61 = vmatpush.xpose.msra.mxu0 0.0
    %62 = vmatpush.xpose.msra.mxu0 %v24
    %63 = vmatmul.f32.gmra.mxu0 %v24
    %v64 = vpop.f32.mrf.mxu0
    %v65 = vadd.f32 %v45, %v64
    %66 = vdwg.mxu0
    %67 = vmatpush.xpose.msra.mxu0 0.0
    %68 = vmatpush.xpose.msra.mxu0 0.0
    %69 = vmatpush.xpose.msra.mxu0 0.0
    %70 = vmatpush.xpose.msra.mxu0 0.0
    %71 = vmatpush.xpose.msra.mxu0 0.0
    %72 = vmatpush.xpose.msra.mxu0 0.0
    %73 = vmatpush.xpose.msra.mxu0 0.0
    %74 = vmatpush.xpose.msra.mxu0 0.0
    %75 = vmatpush.xpose.msra.mxu0 0.0
    %76 = vmatpush.xpose.msra.mxu0 0.0
    %77 = vmatpush.xpose.msra.mxu0 0.0
    %78 = vmatpush.xpose.msra.mxu0 0.0
    %79 = vmatpush.xpose.msra.mxu0 0.0
    %80 = vmatpush.xpose.msra.mxu0 0.0
    %81 = vmatpush.xpose.msra.mxu0 0.0
    %82 = vmatpush.xpose.msra.mxu0 %v25
    %83 = vmatmul.f32.gmra.mxu0 %v25
    %v84 = vpop.f32.mrf.mxu0
    %v85 = vadd.f32 %v65, %v84
    %86 = vdwg.mxu0
    %87 = vmatpush.xpose.msra.mxu0 0.0
    %88 = vmatpush.xpose.msra.mxu0 0.0
    %89 = vmatpush.xpose.msra.mxu0 0.0
    %90 = vmatpush.xpose.msra.mxu0 0.0
    %91 = vmatpush.xpose.msra.mxu0 0.0
    %92 = vmatpush.xpose.msra.mxu0 0.0
    %93 = vmatpush.xpose.msra.mxu0 0.0
    %94 = vmatpush.xpose.msra.mxu0 0.0
    %95 = vmatpush.xpose.msra.mxu0 0.0
    %96 = vmatpush.xpose.msra.mxu0 0.0
    %97 = vmatpush.xpose.msra.mxu0 0.0
    %98 = vmatpush.xpose.msra.mxu0 0.0
    %99 = vmatpush.xpose.msra.mxu0 0.0
    %100 = vmatpush.xpose.msra.mxu0 0.0
    %101 = vmatpush.xpose.msra.mxu0 0.0
    %102 = vmatpush.xpose.msra.mxu0 %v26
    %103 = vmatmul.f32.gmra.mxu0 %v26
    %v104 = vpop.f32.mrf.mxu0
    %v105 = vadd.f32 %v85, %v104
    %106 = vdwg.mxu0
    %v107 = vlaneseq
    %v108 = vshrl.u32 %v107, 7
    %v109 = vlaneseq
    %v110 = vand.u32 %v109, 127
    %vm111 = vcmp.eq.s32.totalorder %v108, %v110
    %v112 = vsel %vm111, %v105, 0.0
    %vm113 = vcmask 64512
    %v114 = vsel %vm113, %v112, 0.0
    %115 = vadd.xlane.f32.xlu0 %v114
    %v116 = vpop.xlane.xlu0 %115
    %v117 = vadd.f32 %v116, 1e-08
    %v118 = vrsqrt.pop %v117
    %v119 = vmul.f32 %v118, %v117
    %v120 = vmul.f32 %v119, %v118
    %v121 = vmul.f32 0.5, %v120
    %v122 = vsub.f32 1.5, %v121
    %v123 = vmul.f32 %v118, %v122
    %v124 = vmul.f32 %v117, %v123
    %vm125 = vcmp.eq.f32.partialorder %v117, inf
    %v126 = vsel %vm125, %v117, %v124
    %vm127 = vcmp.eq.f32.partialorder %v117, 0.0
    %v128 = vand.u32 %v117, 2147483648
    %v129 = vsel %vm127, %v128, %v126
    %v130 = vrot.slane %v129, 4
    %v131 = vadd.f32 %v129, %v130
    %v132 = vrot.slane %v131, 2
    %v133 = vadd.f32 %v131, %v132
    %v134 = vrot.slane %v133, 1
    %v135 = vadd.f32 %v133, %v134
    %v136 = vmul.f32 %v135, 0.125
    %v137 = vrsqrt.pop %v117
    %v138 = vmul.f32 %v137, %v117
    %v139 = vmul.f32 %v138, %v137
    %v140 = vmul.f32 0.5, %v139
    %v141 = vsub.f32 1.5, %v140
    %v142 = vmul.f32 %v137, %v141
    %vm143 = vweird.f32 %v117
    %vm144 = vweird.f32 %v137
    %vm145 = vmor %vm143, %vm144
    %v146 = vsel %vm145, %v137, %v142
    %v147 = vmul.f32 %v136, %v146
    %v148 = vsel %vm111, %v147, 0.0
    %v150 = vsel %vm113, %v148, 0
    %152 = vmatpush.msra.mxu0 0.0
    %153 = vmatpush.msra.mxu0 0.0
    %154 = vmatpush.msra.mxu0 0.0
    %155 = vmatpush.msra.mxu0 0.0
    %156 = vmatpush.msra.mxu0 0.0
    %157 = vmatpush.msra.mxu0 0.0
    %158 = vmatpush.msra.mxu0 0.0
    %159 = vmatpush.msra.mxu0 0.0
    %160 = vmatpush.msra.mxu0 0.0
    %161 = vmatpush.msra.mxu0 0.0
    %162 = vmatpush.msra.mxu0 0.0
    %163 = vmatpush.msra.mxu0 0.0
    %164 = vmatpush.msra.mxu0 0.0
    %165 = vmatpush.msra.mxu0 0.0
    %166 = vmatpush.msra.mxu0 0.0
    %167 = vmatpush.msra.mxu0 %v23
    %168 = vmatmul.f32.gmra.mxu0 %v150
    %v169 = vpop.f32.mrf.mxu0
    %v170 = vadd.f32 0.0, %v169
    %171 = vdwg.mxu0
    %172 = vmatpush.msra.mxu0 0.0
    %173 = vmatpush.msra.mxu0 0.0
    %174 = vmatpush.msra.mxu0 0.0
    %175 = vmatpush.msra.mxu0 0.0
    %176 = vmatpush.msra.mxu0 0.0
    %177 = vmatpush.msra.mxu0 0.0
    %178 = vmatpush.msra.mxu0 0.0
    %179 = vmatpush.msra.mxu0 0.0
    %180 = vmatpush.msra.mxu0 0.0
    %181 = vmatpush.msra.mxu0 0.0
    %182 = vmatpush.msra.mxu0 0.0
    %183 = vmatpush.msra.mxu0 0.0
    %184 = vmatpush.msra.mxu0 0.0
    %185 = vmatpush.msra.mxu0 0.0
    %186 = vmatpush.msra.mxu0 0.0
    %187 = vmatpush.msra.mxu0 %v24
    %188 = vmatmul.f32.gmra.mxu0 %v150
    %v189 = vpop.f32.mrf.mxu0
    %v190 = vadd.f32 0.0, %v189
    %191 = vdwg.mxu0
    %192 = vmatpush.msra.mxu0 0.0
    %193 = vmatpush.msra.mxu0 0.0
    %194 = vmatpush.msra.mxu0 0.0
    %195 = vmatpush.msra.mxu0 0.0
    %196 = vmatpush.msra.mxu0 0.0
    %197 = vmatpush.msra.mxu0 0.0
    %198 = vmatpush.msra.mxu0 0.0
    %199 = vmatpush.msra.mxu0 0.0
    %200 = vmatpush.msra.mxu0 0.0
    %201 = vmatpush.msra.mxu0 0.0
    %202 = vmatpush.msra.mxu0 0.0
    %203 = vmatpush.msra.mxu0 0.0
    %204 = vmatpush.msra.mxu0 0.0
    %205 = vmatpush.msra.mxu0 0.0
    %206 = vmatpush.msra.mxu0 0.0
    %207 = vmatpush.msra.mxu0 %v25
    %208 = vmatmul.f32.gmra.mxu0 %v150
    %v209 = vpop.f32.mrf.mxu0
    %v210 = vadd.f32 0.0, %v209
    %211 = vdwg.mxu0
    %212 = vmatpush.msra.mxu0 0.0
    %213 = vmatpush.msra.mxu0 0.0
    %214 = vmatpush.msra.mxu0 0.0
    %215 = vmatpush.msra.mxu0 0.0
    %216 = vmatpush.msra.mxu0 0.0
    %217 = vmatpush.msra.mxu0 0.0
    %218 = vmatpush.msra.mxu0 0.0
    %219 = vmatpush.msra.mxu0 0.0
    %220 = vmatpush.msra.mxu0 0.0
    %221 = vmatpush.msra.mxu0 0.0
    %222 = vmatpush.msra.mxu0 0.0
    %223 = vmatpush.msra.mxu0 0.0
    %224 = vmatpush.msra.mxu0 0.0
    %225 = vmatpush.msra.mxu0 0.0
    %226 = vmatpush.msra.mxu0 0.0
    %227 = vmatpush.msra.mxu0 %v26
    %228 = vmatmul.f32.gmra.mxu0 %v150
    %v229 = vpop.f32.mrf.mxu0
    %v230 = vadd.f32 0.0, %v229
    %231 = vdwg.mxu0
    %232 = vst [vmem:[#allocation5] sm:$0xff] %v170
    %233 = vst [vmem:[#allocation5 + $0x8] sm:$0xff] %v190
    %234 = vst [vmem:[#allocation5 + $0x10] sm:$0xff] %v210
    %235 = vst [vmem:[#allocation5 + $0x18] sm:$0xff] %v230
    // Predicated region
    $region10: #{tpu_custom_call.1} parent=1 // pred_check
      _
    $region11: #{tpu_custom_call.1} parent=1 // pred_check_branch
      %237 = sbr.rel (0) target = $region13
    $region12: #{tpu_custom_call.1} parent=1 // pred_region
      %239 = vsyncadd [#allocation4], 0
      %s241 = sshll.u32 [#allocation5], 4
      %s242 = int_to_ptr.vmem [resolvable:$true] %s241
      %s243 = sshll.u32 %s1, 4
      %s244 = int_to_ptr.hbm [resolvable:$true] %s243
      %246 = dma.vmem_to_hbm [thread:$0]  %s242, 512, %s244, [#allocation4]
    $region13: #{tpu_custom_call.1} parent=1 // pred_fallthru
      _
    // Predicated region
    $region14: #{tpu_custom_call.1} parent=1 // pred_check
      _
    $region15: #{tpu_custom_call.1} parent=1 // pred_check_branch
      %248 = sbr.rel (0) target = $region17
    $region16: #{tpu_custom_call.1} parent=1 // pred_region
      %250 = dma.done [#allocation4], 512
    $region17: #{tpu_custom_call.1} parent=1 // pred_fallthru
      _
    %251 = vsyncpa [#allocation3], 1
    %252 = vsyncpa [#allocation4], 1

</llo_original>
